<compile_context>
chip_gen: v7x
topology: tpu7x:2x2x1
jax: 0.10.0
libtpu: 0.0.40
codegen_flags: <defaults>
</compile_context>

<pallas_src>
import functools

import jax
import jax.numpy as jnp
from jax.experimental import pallas as pl
from jax.experimental.pallas import tpu as pltpu


# ----------------------------- fused Pallas kernel -------------------------- #

def _gcn_gets_fused_kernel(adj_ref, logits_ref, feat_ref, wa_ref, wb_ref, out_ref,
                           *, max_degree, off_feat, off_deg, off_b1, off_b2):
    f32 = jnp.float32
    n = adj_ref.shape[0]
    c = logits_ref.shape[1]          # num_classes (logits width)
    fdim = feat_ref.shape[1]         # raw feature dim
    hid = wa_ref.shape[1]            # hidden dim

    adj = adj_ref[...]                                            # (N, N) 0/1

    # ---- degrees & norms, fully in-kernel (no wrapper XLA ops over adj) ----
    in_deg = jnp.sum(adj, axis=1, keepdims=True)                  # (N,1) lane-reduce
    ones_row = jnp.ones((1, n), f32)
    out_deg_row = jnp.dot(ones_row, adj, preferred_element_type=f32)   # (1,N) MXU
    # (1,N) row -> (N,1) column with bulletproof iota/compare/mul/lane-reduce ops.
    # At much larger N, precompute degrees host-side or use a transposed dot.
    ri = jax.lax.broadcasted_iota(jnp.int32, (n, n), 0)
    ci = jax.lax.broadcasted_iota(jnp.int32, (n, n), 1)
    eye = (ri == ci).astype(f32)
    out_deg = jnp.sum(eye * out_deg_row, axis=1, keepdims=True)   # (N,1)

    in_norm = jax.lax.rsqrt(jnp.maximum(in_deg, 1.0))             # D_in^{-1/2}
    out_norm = jax.lax.rsqrt(jnp.maximum(out_deg, 1.0))           # D_out^{-1/2}

    # ---- degree-embedding lookup fused as a one-hot MXU matmul -------------
    # (index clamped: an out-of-range degree can't silently become a zero row)
    deg_idx = jnp.clip((in_deg + out_deg).astype(jnp.int32), 0, max_degree - 1)
    dcol = jax.lax.broadcasted_iota(jnp.int32, (n, max_degree), 1)
    onehot = (dcol == deg_idx).astype(f32)                        # (N, MAXD)

    # ---- static slices of the packed parameter slabs -----------------------
    w1_logits = wa_ref[0:c, :]                                    # (c, H)
    w_feat    = wa_ref[off_feat:off_feat + fdim, :]               # (F, H) = w_proj@W1_f
    t_fold    = wa_ref[off_deg:off_deg + max_degree, :]           # deg_table@W1_d + b_proj@W1_f
    b1        = wa_ref[off_b1:off_b1 + 1, :]                      # (1, H)
    w2        = wb_ref[0:hid, :]                                  # (H, 128 pad)
    b2        = wb_ref[off_b2:off_b2 + 1, :]                      # (1, 128 pad)

    # z = concat([logits, feats_h, deg_emb], -1) @ W1, with the feature
    # projection and embedding table pre-folded (exact block-matrix algebra).
    z = (jnp.dot(logits_ref[...], w1_logits, preferred_element_type=f32)
         + jnp.dot(feat_ref[...], w_feat, preferred_element_type=f32)
         + jnp.dot(onehot, t_fold, preferred_element_type=f32))   # (N, H)

    # GraphConv 1: A_hat never materialized — scale z by out_norm (per src
    # node), aggregate with the raw adjacency, scale by in_norm (per dst node).
    h1 = jnp.maximum(
        in_norm * jnp.dot(adj, out_norm * z, preferred_element_type=f32) + b1,
        0.0)
    # TODO(synk): F.dropout(x, p, self.training) is identity here (eval mode).

    # GraphConv 2: contract to the (128-padded) class width BEFORE the NxN
    # aggregation; lane-dense output store.
    y = jnp.dot(h1, w2, preferred_element_type=f32)               # (N, 128 pad)
    out_ref[...] = (in_norm * jnp.dot(adj, out_norm * y, preferred_element_type=f32)
                    + b2)


# ------------------------- one-time parameter prep -------------------------- #

def _round_up(x, m):
    return (x + m - 1) // m * m


def prepare_params(params, *, max_degree):
    """Fold chained linears and pack everything into two lane-dense slabs.

    Runs ONCE, outside the jitted forward (no per-call weight prep in the hot
    path).  Returns the two slabs plus the static row-offset layout.
    """
    w_proj = jnp.asarray(params["w_proj"], jnp.float32)
    b_proj = jnp.asarray(params["b_proj"], jnp.float32).reshape(1, -1)
    deg_table = jnp.asarray(params["deg_table"], jnp.float32)
    w1 = jnp.asarray(params["w1"], jnp.float32)
    b1 = jnp.asarray(params["b1"], jnp.float32).reshape(1, -1)
    w2 = jnp.asarray(params["w2"], jnp.float32)
    b2 = jnp.asarray(params["b2"], jnp.float32).reshape(1, -1)

    feat_dim, fh = w_proj.shape
    dh = deg_table.shape[1]
    hidden = w1.shape[1]
    nc = w1.shape[0] - fh - dh                # logits width (num_classes)
    num_out = w2.shape[1]
    assert deg_table.shape[0] == max_degree

    # Split W1 along its input axis (concat folded into separate matmuls).
    w1_l = w1[:nc]
    w1_f = w1[nc:nc + fh]
    w1_d = w1[nc + fh:]

    # Fold chained linears:
    #   feats_h @ W1_f = features @ (w_proj @ W1_f) + b_proj @ W1_f
    #   deg_emb @ W1_d = onehot @ (deg_table @ W1_d)
    # The constant b_proj@W1_f row folds exactly into every row of the folded
    # table because each one-hot row sums to exactly 1 (index is clamped).
    w_feat_fold = w_proj @ w1_f                                   # (F, H)
    t_fold = deg_table @ w1_d + b_proj @ w1_f                     # (MAXD, H)

    # Slab A (lane width = hidden): 8-aligned row offsets for clean slices.
    off_feat = _round_up(nc, 8)
    off_deg = off_feat + _round_up(feat_dim, 8)
    off_b1 = off_deg + _round_up(max_degree, 8)
    rows_a = off_b1 + 8
    slab_a = jnp.zeros((rows_a, hidden), jnp.float32)
    slab_a = slab_a.at[:nc].set(w1_l)
    slab_a = slab_a.at[off_feat:off_feat + feat_dim].set(w_feat_fold)
    slab_a = slab_a.at[off_deg:off_deg + max_degree].set(t_fold)
    slab_a = slab_a.at[off_b1:off_b1 + 1].set(b1)

    # Slab B (lane width = 128): zero-padded W2 / b2 so the kernel output is
    # 128-lane dense (unmasked vst); sliced back to num_classes in the wrapper.
    lane_pad = _round_up(max(num_out, 1), 128)
    off_b2 = _round_up(hidden, 8)
    rows_b = off_b2 + 8
    slab_b = jnp.zeros((rows_b, lane_pad), jnp.float32)
    slab_b = slab_b.at[:hidden, :num_out].set(w2)
    slab_b = slab_b.at[off_b2:off_b2 + 1, :num_out].set(b2)

    return dict(slab_a=slab_a, slab_b=slab_b, max_degree=max_degree,
                off_feat=off_feat, off_deg=off_deg, off_b1=off_b1,
                off_b2=off_b2, num_classes=num_out)


# --------------------------------- wrapper ---------------------------------- #

def gcn_gets_forward(adj, logits, features, slab_a, slab_b, *,
                     max_degree, off_feat, off_deg, off_b1, off_b2, num_classes):
    """adj[dst, src] = 1.0 for an edge src->dst (dense adjacency)."""
    n = adj.shape[0]
    lane_pad = slab_b.shape[1]

    kernel = functools.partial(
        _gcn_gets_fused_kernel, max_degree=max_degree, off_feat=off_feat,
        off_deg=off_deg, off_b1=off_b1, off_b2=off_b2)

    inputs = (adj, logits, features, slab_a, slab_b)
    out_padded = pl.pallas_call(
        kernel,
        out_shape=jax.ShapeDtypeStruct((n, lane_pad), jnp.float32),
        grid=(1,),
        in_specs=[pl.BlockSpec(x.shape, lambda i: (0, 0)) for x in inputs],
        out_specs=pl.BlockSpec((n, lane_pad), lambda i: (0, 0)),
        compiler_params=pltpu.CompilerParams(dimension_semantics=("arbitrary",)),
    )(*inputs)
    return out_padded[:, :num_classes]


# ------------------------ pure-JAX reference (validation) ------------------- #

def _reference_forward(adj, logits, features, params):
    in_deg = jnp.sum(adj, axis=1)
    out_deg = jnp.sum(adj, axis=0)
    in_norm = jax.lax.rsqrt(jnp.maximum(in_deg, 1.0))
    out_norm = jax.lax.rsqrt(jnp.maximum(out_deg, 1.0))
    a_hat = in_norm[:, None] * adj * out_norm[None, :]
    feats_h = features @ params["w_proj"] + params["b_proj"]
    deg_idx = (in_deg + out_deg).astype(jnp.int32)
    deg_emb = params["deg_table"][deg_idx]
    x = jnp.concatenate([logits, feats_h, deg_emb], axis=-1)
    h1 = jax.nn.relu(a_hat @ (x @ params["w1"]) + params["b1"])
    return a_hat @ (h1 @ params["w2"]) + params["b2"]


# ----------------------------------- main ------------------------------------ #

if __name__ == "__main__":
    key = jax.random.PRNGKey(0)
    ks = jax.random.split(key, 10)

    # Small shapes consistent with the module.
    N = 64
    num_classes = 4
    feature_dim = 16
    feature_hidden_dim = 8
    degree_hidden_dim = 8
    hidden_dim = 32
    in_channels = num_classes + feature_hidden_dim + degree_hidden_dim  # 20

    # Static embedding-table size covering every possible in+out degree (< 2N).
    # TODO(synk): the torch module sizes the table lazily as degrees.max()+1 at
    # first forward (data-dependent); we use a static config max instead.
    MAX_DEGREE = 2 * N

    # Deterministic random graph (dense adjacency, no self loops).
    adj = (jax.random.uniform(ks[0], (N, N)) < 0.1).astype(jnp.float32)
    adj = adj * (1.0 - jnp.eye(N, dtype=jnp.float32))

    logits = jax.random.normal(ks[1], (N, num_classes), dtype=jnp.float32)
    features = jax.random.normal(ks[2], (N, feature_dim), dtype=jnp.float32)

    # Deterministic synthetic parameters (not a checkpoint load).
    params = {
        "w_proj": 0.1 * jax.random.normal(ks[3], (feature_dim, feature_hidden_dim), jnp.float32),
        "b_proj": 0.1 * jax.random.normal(ks[4], (1, feature_hidden_dim), jnp.float32),
        "deg_table": 0.1 * jax.random.normal(ks[5], (MAX_DEGREE, degree_hidden_dim), jnp.float32),
        "w1": 0.1 * jax.random.normal(ks[6], (in_channels, hidden_dim), jnp.float32),
        "b1": 0.1 * jax.random.normal(ks[7], (1, hidden_dim), jnp.float32),
        "w2": 0.1 * jax.random.normal(ks[8], (hidden_dim, num_classes), jnp.float32),
        "b2": 0.1 * jax.random.normal(ks[9], (1, num_classes), jnp.float32),
    }

    # One-time weight folding / slab packing (outside the jitted hot path).
    prep = prepare_params(params, max_degree=MAX_DEGREE)
    static = {k: prep[k] for k in ("max_degree", "off_feat", "off_deg",
                                   "off_b1", "off_b2", "num_classes")}

    fwd = jax.jit(functools.partial(gcn_gets_forward, **static))
    out = fwd(adj, logits, features, prep["slab_a"], prep["slab_b"])
    jax.block_until_ready(out)
    assert out.shape == (N, num_classes), out.shape

    # Validate against a pure-JAX transcription of the torch module.
    ref = _reference_forward(adj, logits, features, params)
    max_err = float(jnp.max(jnp.abs(out - ref)))
    assert max_err < 1e-3, f"max |kernel - reference| = {max_err}"

    print("KERNEL_OK")
</pallas_src>

<mosaic_0001>
module attributes {stable_mosaic.version = 11 : i64} {
  func.func @_gcn_gets_fused_kernel(%arg0: i32, %arg1: memref<64x64xf32, #tpu.memory_space<vmem>>, %arg2: memref<64x4xf32, #tpu.memory_space<vmem>>, %arg3: memref<64x16xf32, #tpu.memory_space<vmem>>, %arg4: memref<160x32xf32, #tpu.memory_space<vmem>>, %arg5: memref<40x128xf32, #tpu.memory_space<vmem>>, %arg6: memref<64x128xf32, #tpu.memory_space<vmem>>) attributes {dimension_semantics = [#tpu.dimension_semantics<arbitrary>], iteration_bounds = array<i64: 1>, scalar_prefetch = 0 : i64, scratch_operands = 0 : i64, tpu.core_type = #tpu.core_type<tc>, window_params = [{pipeline_mode = #tpu.pipeline_mode<synchronous>, transform_indices = @transform_0, window_bounds = array<i64: 64, 64>}, {pipeline_mode = #tpu.pipeline_mode<synchronous>, transform_indices = @transform_1, window_bounds = array<i64: 64, 4>}, {pipeline_mode = #tpu.pipeline_mode<synchronous>, transform_indices = @transform_2, window_bounds = array<i64: 64, 16>}, {pipeline_mode = #tpu.pipeline_mode<synchronous>, transform_indices = @transform_3, window_bounds = array<i64: 160, 32>}, {pipeline_mode = #tpu.pipeline_mode<synchronous>, transform_indices = @transform_4, window_bounds = array<i64: 40, 128>}, {pipeline_mode = #tpu.pipeline_mode<synchronous>, transform_indices = @transform_5, window_bounds = array<i64: 64, 128>}]} {
    %c0 = arith.constant 0 : index
    %c0_0 = arith.constant 0 : index
    %0 = vector.load %arg1[%c0, %c0_0] : memref<64x64xf32, #tpu.memory_space<vmem>>, vector<64x64xf32>
    %cst = arith.constant dense<0.000000e+00> : vector<64xf32>
    %1 = vector.multi_reduction <add>, %0, %cst [1] : vector<64x64xf32> to vector<64xf32>
    %2 = vector.shape_cast %1 : vector<64xf32> to vector<64x1xf32>
    %cst_1 = arith.constant 1.000000e+00 : f32
    %3 = vector.broadcast %cst_1 : f32 to vector<1x64xf32>
    %cst_2 = arith.constant dense<0.000000e+00> : vector<1x64xf32>
    %4 = tpu.matmul %3, %0, %cst_2 {dimension_numbers = #tpu.dot_dimension_numbers<[1], [0], [0], [1], [0, 0, 1, 1], [], []>} : vector<1x64xf32>, vector<64x64xf32>, vector<1x64xf32> -> vector<1x64xf32>
    %5 = tpu.iota {dimensions = array<i32: 0>} : vector<64x64xi32>
    %6 = tpu.iota {dimensions = array<i32: 1>} : vector<64x64xi32>
    %7 = arith.cmpi eq, %5, %6 : vector<64x64xi32>
    %8 = arith.extui %7 : vector<64x64xi1> to vector<64x64xi32>
    %9 = arith.sitofp %8 : vector<64x64xi32> to vector<64x64xf32>
    %10 = vector.broadcast %4 : vector<1x64xf32> to vector<64x64xf32>
    %11 = arith.mulf %9, %10 : vector<64x64xf32>
    %cst_3 = arith.constant dense<0.000000e+00> : vector<64xf32>
    %12 = vector.multi_reduction <add>, %11, %cst_3 [1] : vector<64x64xf32> to vector<64xf32>
    %13 = vector.shape_cast %12 : vector<64xf32> to vector<64x1xf32>
    %cst_4 = arith.constant 1.000000e+00 : f32
    %14 = vector.broadcast %cst_4 : f32 to vector<64x1xf32>
    %15 = arith.maximumf %2, %14 : vector<64x1xf32>
    %16 = math.rsqrt %15 : vector<64x1xf32>
    %cst_5 = arith.constant 1.000000e+00 : f32
    %17 = vector.broadcast %cst_5 : f32 to vector<64x1xf32>
    %18 = arith.maximumf %13, %17 : vector<64x1xf32>
    %19 = math.rsqrt %18 : vector<64x1xf32>
    %20 = arith.addf %2, %13 : vector<64x1xf32>
    %21 = arith.fptosi %20 : vector<64x1xf32> to vector<64x1xi32>
    %c0_i32 = arith.constant 0 : i32
    %c127_i32 = arith.constant 127 : i32
    %22 = vector.broadcast %c0_i32 : i32 to vector<64x1xi32>
    %23 = arith.maxsi %22, %21 : vector<64x1xi32>
    %24 = vector.broadcast %c127_i32 : i32 to vector<64x1xi32>
    %25 = arith.minsi %24, %23 : vector<64x1xi32>
    %26 = tpu.iota {dimensions = array<i32: 1>} : vector<64x128xi32>
    %27 = vector.broadcast %25 : vector<64x1xi32> to vector<64x128xi32>
    %28 = arith.cmpi eq, %26, %27 : vector<64x128xi32>
    %29 = arith.extui %28 : vector<64x128xi1> to vector<64x128xi32>
    %30 = arith.sitofp %29 : vector<64x128xi32> to vector<64x128xf32>
    %c0_6 = arith.constant 0 : index
    %c0_7 = arith.constant 0 : index
    %31 = vector.load %arg4[%c0_6, %c0_7] : memref<160x32xf32, #tpu.memory_space<vmem>>, vector<4x32xf32>
    %c8 = arith.constant 8 : index
    %c0_8 = arith.constant 0 : index
    %32 = vector.load %arg4[%c8, %c0_8] : memref<160x32xf32, #tpu.memory_space<vmem>>, vector<16x32xf32>
    %c24 = arith.constant 24 : index
    %c0_9 = arith.constant 0 : index
    %33 = vector.load %arg4[%c24, %c0_9] : memref<160x32xf32, #tpu.memory_space<vmem>>, vector<128x32xf32>
    %c152 = arith.constant 152 : index
    %c0_10 = arith.constant 0 : index
    %34 = vector.load %arg4[%c152, %c0_10] : memref<160x32xf32, #tpu.memory_space<vmem>>, vector<1x32xf32>
    %c0_11 = arith.constant 0 : index
    %c0_12 = arith.constant 0 : index
    %35 = vector.load %arg5[%c0_11, %c0_12] : memref<40x128xf32, #tpu.memory_space<vmem>>, vector<32x128xf32>
    %c32 = arith.constant 32 : index
    %c0_13 = arith.constant 0 : index
    %36 = vector.load %arg5[%c32, %c0_13] : memref<40x128xf32, #tpu.memory_space<vmem>>, vector<1x128xf32>
    %c0_14 = arith.constant 0 : index
    %c0_15 = arith.constant 0 : index
    %37 = vector.load %arg2[%c0_14, %c0_15] : memref<64x4xf32, #tpu.memory_space<vmem>>, vector<64x4xf32>
    %cst_16 = arith.constant dense<0.000000e+00> : vector<64x32xf32>
    %38 = tpu.matmul %37, %31, %cst_16 {dimension_numbers = #tpu.dot_dimension_numbers<[1], [0], [0], [1], [0, 0, 1, 1], [], []>} : vector<64x4xf32>, vector<4x32xf32>, vector<64x32xf32> -> vector<64x32xf32>
    %c0_17 = arith.constant 0 : index
    %c0_18 = arith.constant 0 : index
    %39 = vector.load %arg3[%c0_17, %c0_18] : memref<64x16xf32, #tpu.memory_space<vmem>>, vector<64x16xf32>
    %cst_19 = arith.constant dense<0.000000e+00> : vector<64x32xf32>
    %40 = tpu.matmul %39, %32, %cst_19 {dimension_numbers = #tpu.dot_dimension_numbers<[1], [0], [0], [1], [0, 0, 1, 1], [], []>} : vector<64x16xf32>, vector<16x32xf32>, vector<64x32xf32> -> vector<64x32xf32>
    %41 = arith.addf %38, %40 : vector<64x32xf32>
    %cst_20 = arith.constant dense<0.000000e+00> : vector<64x32xf32>
    %42 = tpu.matmul %30, %33, %cst_20 {dimension_numbers = #tpu.dot_dimension_numbers<[1], [0], [0], [1], [0, 0, 1, 1], [], []>} : vector<64x128xf32>, vector<128x32xf32>, vector<64x32xf32> -> vector<64x32xf32>
    %43 = arith.addf %41, %42 : vector<64x32xf32>
    %44 = vector.broadcast %19 : vector<64x1xf32> to vector<64x32xf32>
    %45 = arith.mulf %44, %43 : vector<64x32xf32>
    %cst_21 = arith.constant dense<0.000000e+00> : vector<64x32xf32>
    %46 = tpu.matmul %0, %45, %cst_21 {dimension_numbers = #tpu.dot_dimension_numbers<[1], [0], [0], [1], [0, 0, 1, 1], [], []>} : vector<64x64xf32>, vector<64x32xf32>, vector<64x32xf32> -> vector<64x32xf32>
    %47 = vector.broadcast %16 : vector<64x1xf32> to vector<64x32xf32>
    %48 = arith.mulf %47, %46 : vector<64x32xf32>
    %49 = vector.broadcast %34 : vector<1x32xf32> to vector<64x32xf32>
    %50 = arith.addf %48, %49 : vector<64x32xf32>
    %cst_22 = arith.constant 0.000000e+00 : f32
    %51 = vector.broadcast %cst_22 : f32 to vector<64x32xf32>
    %52 = arith.maximumf %50, %51 : vector<64x32xf32>
    %cst_23 = arith.constant dense<0.000000e+00> : vector<64x128xf32>
    %53 = tpu.matmul %52, %35, %cst_23 {dimension_numbers = #tpu.dot_dimension_numbers<[1], [0], [0], [1], [0, 0, 1, 1], [], []>} : vector<64x32xf32>, vector<32x128xf32>, vector<64x128xf32> -> vector<64x128xf32>
    %54 = vector.broadcast %19 : vector<64x1xf32> to vector<64x128xf32>
    %55 = arith.mulf %54, %53 : vector<64x128xf32>
    %cst_24 = arith.constant dense<0.000000e+00> : vector<64x128xf32>
    %56 = tpu.matmul %0, %55, %cst_24 {dimension_numbers = #tpu.dot_dimension_numbers<[1], [0], [0], [1], [0, 0, 1, 1], [], []>} : vector<64x64xf32>, vector<64x128xf32>, vector<64x128xf32> -> vector<64x128xf32>
    %57 = vector.broadcast %16 : vector<64x1xf32> to vector<64x128xf32>
    %58 = arith.mulf %57, %56 : vector<64x128xf32>
    %59 = vector.broadcast %36 : vector<1x128xf32> to vector<64x128xf32>
    %60 = arith.addf %58, %59 : vector<64x128xf32>
    %c0_25 = arith.constant 0 : index
    %c0_26 = arith.constant 0 : index
    %61 = vector.load %arg6[%c0_25, %c0_26] : memref<64x128xf32, #tpu.memory_space<vmem>>, vector<64x128xf32>
    tpu.vector_store %arg6[%c0_25, %c0_26], %60 {strides = array<i32>} : memref<64x128xf32, #tpu.memory_space<vmem>>, vector<64x128xf32>,
    return
  }
  func.func @transform_0(%arg0: i32) -> (i32, i32) {
    %c0_i32 = arith.constant 0 : i32
    %c0_i32_0 = arith.constant 0 : i32
    %c0_i32_1 = arith.constant 0 : i32
    return %c0_i32, %c0_i32_0 : i32, i32
  }
  func.func @transform_1(%arg0: i32) -> (i32, i32) {
    %c0_i32 = arith.constant 0 : i32
    %c0_i32_0 = arith.constant 0 : i32
    %c0_i32_1 = arith.constant 0 : i32
    return %c0_i32, %c0_i32_0 : i32, i32
  }
  func.func @transform_2(%arg0: i32) -> (i32, i32) {
    %c0_i32 = arith.constant 0 : i32
    %c0_i32_0 = arith.constant 0 : i32
    %c0_i32_1 = arith.constant 0 : i32
    return %c0_i32, %c0_i32_0 : i32, i32
  }
  func.func @transform_3(%arg0: i32) -> (i32, i32) {
    %c0_i32 = arith.constant 0 : i32
    %c0_i32_0 = arith.constant 0 : i32
    %c0_i32_1 = arith.constant 0 : i32
    return %c0_i32, %c0_i32_0 : i32, i32
  }
  func.func @transform_4(%arg0: i32) -> (i32, i32) {
    %c0_i32 = arith.constant 0 : i32
    %c0_i32_0 = arith.constant 0 : i32
    %c0_i32_1 = arith.constant 0 : i32
    return %c0_i32, %c0_i32_0 : i32, i32
  }
  func.func @transform_5(%arg0: i32) -> (i32, i32) {
    %c0_i32 = arith.constant 0 : i32
    %c0_i32_0 = arith.constant 0 : i32
    %c0_i32_1 = arith.constant 0 : i32
    return %c0_i32, %c0_i32_0 : i32, i32
  }
}

</mosaic_0001>

<llo_original>
// kernel: gcn_gets_forward.1
$region0: #{gcn_gets_forward.1}
  #allocation0 [shape = 'u32[]', space=smem, size = 0x4, offset = 0x4, fixed_abs, tag = 'smem constant byte address 0x4 - core index']
  #allocation1 [shape = 'u32[144,128]{1,0:T(1,128)}', space=vmem, size = 0x12000, scoped, tag = 'internal scratch']
  %s0 = inlined_call_operand.vmem [shape: f32[64,64], index: 0, kind: input, shape index: {}]
  %s1 = inlined_call_operand.vmem [shape: f32[64,4], index: 1, kind: input, shape index: {}]
  %s2 = inlined_call_operand.vmem [shape: f32[64,16], index: 2, kind: input, shape index: {}]
  %s3 = inlined_call_operand.vmem [shape: f32[160,32], index: 3, kind: input, shape index: {}]
  %s4 = inlined_call_operand.vmem [shape: f32[40,128], index: 4, kind: input, shape index: {}]
  %s5 = inlined_call_operand.vmem [shape: f32[64,128], index: 5, kind: output, shape index: {}]
  %s6 = sld [smem:[#allocation0]]
  $region30: #{gcn_gets_forward.1} parent=0
    _
  %s8 = ssub.s32 1, %s6
  %s9 = scalar_select 0, %s8, %s6
  // Predicated region
  $region2: #{gcn_gets_forward.1} parent=0 // pred_check
    _
  $region3: #{gcn_gets_forward.1} parent=0 // pred_check_branch
    %11 = sbr.rel (0) target = $region5
  $region4: #{gcn_gets_forward.1} parent=0 // pred_region
    _
  $region5: #{gcn_gets_forward.1} parent=0 // pred_fallthru
    _
  // Predicated region
  $region6: #{gcn_gets_forward.1} parent=0 // pred_check
    _
  $region7: #{gcn_gets_forward.1} parent=0 // pred_check_branch
    %13 = sbr.rel (0) target = $region9
  $region8: #{gcn_gets_forward.1} parent=0 // pred_region
    _
  $region9: #{gcn_gets_forward.1} parent=0 // pred_fallthru
    _
  // Predicated region
  $region10: #{gcn_gets_forward.1} parent=0 // pred_check
    _
  $region11: #{gcn_gets_forward.1} parent=0 // pred_check_branch
    %15 = sbr.rel (0) target = $region13
  $region12: #{gcn_gets_forward.1} parent=0 // pred_region
    _
  $region13: #{gcn_gets_forward.1} parent=0 // pred_fallthru
    _
  // Predicated region
  $region14: #{gcn_gets_forward.1} parent=0 // pred_check
    _
  $region15: #{gcn_gets_forward.1} parent=0 // pred_check_branch
    %17 = sbr.rel (0) target = $region17
  $region16: #{gcn_gets_forward.1} parent=0 // pred_region
    _
  $region17: #{gcn_gets_forward.1} parent=0 // pred_fallthru
    _
  // Predicated region
  $region18: #{gcn_gets_forward.1} parent=0 // pred_check
    _
  $region19: #{gcn_gets_forward.1} parent=0 // pred_check_branch
    %19 = sbr.rel (0) target = $region21
  $region20: #{gcn_gets_forward.1} parent=0 // pred_region
    _
  $region21: #{gcn_gets_forward.1} parent=0 // pred_fallthru
    _
  %v20 = vld [vmem:[%s0] sm:$0xff]
  %v21 = vld [vmem:[%s0 + $0x8] sm:$0xff]
  %v22 = vld [vmem:[%s0 + $0x10] sm:$0xff]
  %v23 = vld [vmem:[%s0 + $0x18] sm:$0xff]
  %v24 = vld [vmem:[%s0 + $0x20] sm:$0xff]
  %v25 = vld [vmem:[%s0 + $0x28] sm:$0xff]
  %v26 = vld [vmem:[%s0 + $0x30] sm:$0xff]
  %v27 = vld [vmem:[%s0 + $0x38] sm:$0xff]
  %vm28 = vcmask 523264
  %v29 = vsel %vm28, %v20, 0.0
  %30 = vadd.xlane.f32.xlu0 %v29
  %v31 = vpop.xlane.xlu0 %30
  %v32 = vsel %vm28, %v21, 0.0
  %33 = vadd.xlane.f32.xlu0 %v32
  %v34 = vpop.xlane.xlu0 %33
  %v35 = vsel %vm28, %v22, 0.0
  %36 = vadd.xlane.f32.xlu0 %v35
  %v37 = vpop.xlane.xlu0 %36
  %v38 = vsel %vm28, %v23, 0.0
  %39 = vadd.xlane.f32.xlu0 %v38
  %v40 = vpop.xlane.xlu0 %39
  %v41 = vsel %vm28, %v24, 0.0
  %42 = vadd.xlane.f32.xlu0 %v41
  %v43 = vpop.xlane.xlu0 %42
  %v44 = vsel %vm28, %v25, 0.0
  %45 = vadd.xlane.f32.xlu0 %v44
  %v46 = vpop.xlane.xlu0 %45
  %v47 = vsel %vm28, %v26, 0.0
  %48 = vadd.xlane.f32.xlu0 %v47
  %v49 = vpop.xlane.xlu0 %48
  %v50 = vsel %vm28, %v27, 0.0
  %51 = vadd.xlane.f32.xlu0 %v50
  %v52 = vpop.xlane.xlu0 %51
  %v54 = vsel %vm28, 1.0, 0
  %56 = vmatprep.subr.mxu0 0.0
  %57 = vmatpush1.msra.mxu0 %v20
  %58 = vmatprep.subr.mxu0 0.0
  %59 = vmatpush1.msra.mxu0 %v21
  %60 = vmatprep.subr.mxu0 0.0
  %61 = vmatpush1.msra.mxu0 %v22
  %62 = vmatprep.subr.mxu0 0.0
  %63 = vmatpush1.msra.mxu0 %v23
  %64 = vmatprep.subr.mxu0 0.0
  %65 = vmatpush1.msra.mxu0 %v24
  %66 = vmatprep.subr.mxu0 0.0
  %67 = vmatpush1.msra.mxu0 %v25
  %68 = vmatprep.subr.mxu0 0.0
  %69 = vmatpush1.msra.mxu0 %v26
  %70 = vmatprep.subr.mxu0 0.0
  %71 = vmatpush1.msra.mxu0 %v27
  %72 = vmatprep.subr.mxu0 0.0
  %73 = vmatpush1.msra.mxu0 0.0
  %74 = vmatprep.subr.mxu0 0.0
  %75 = vmatpush1.msra.mxu0 0.0
  %76 = vmatprep.subr.mxu0 0.0
  %77 = vmatpush1.msra.mxu0 0.0
  %78 = vmatprep.subr.mxu0 0.0
  %79 = vmatpush1.msra.mxu0 0.0
  %80 = vmatprep.subr.mxu0 0.0
  %81 = vmatpush1.msra.mxu0 0.0
  %82 = vmatprep.subr.mxu0 0.0
  %83 = vmatpush1.msra.mxu0 0.0
  %84 = vmatprep.subr.mxu0 0.0
  %85 = vmatpush1.msra.mxu0 0.0
  %86 = vmatprep.subr.mxu0 0.0
  %87 = vmatpush1.msra.mxu0 0.0
  %88 = vmatprep.subr.mxu0 0.0
  %89 = vmatpush1.msra.mxu0 0.0
  %90 = vmatprep.subr.mxu0 0.0
  %91 = vmatpush1.msra.mxu0 0.0
  %92 = vmatprep.subr.mxu0 0.0
  %93 = vmatpush1.msra.mxu0 0.0
  %94 = vmatprep.subr.mxu0 0.0
  %95 = vmatpush1.msra.mxu0 0.0
  %96 = vmatprep.subr.mxu0 0.0
  %97 = vmatpush1.msra.mxu0 0.0
  %98 = vmatprep.subr.mxu0 0.0
  %99 = vmatpush1.msra.mxu0 0.0
  %100 = vmatprep.subr.mxu0 0.0
  %101 = vmatpush1.msra.mxu0 0.0
  %102 = vmatprep.subr.mxu0 0.0
  %103 = vmatpush1.msra.mxu0 0.0
  %104 = vmatprep.subr.mxu0 0.0
  %105 = vmatpush1.msra.mxu0 0.0
  %106 = vmatprep.subr.mxu0 0.0
  %107 = vmatpush1.msra.mxu0 0.0
  %108 = vmatprep.subr.mxu0 0.0
  %109 = vmatpush1.msra.mxu0 0.0
  %110 = vmatprep.subr.mxu0 0.0
  %111 = vmatpush1.msra.mxu0 0.0
  %112 = vmatprep.subr.mxu0 0.0
  %113 = vmatpush1.msra.mxu0 0.0
  %114 = vmatprep.subr.mxu0 0.0
  %115 = vmatpush1.msra.mxu0 0.0
  %116 = vmatprep.subr.mxu0 0.0
  %117 = vmatpush1.msra.mxu0 0.0
  %118 = vmatprep.subr.mxu0 0.0
  %119 = vmatpush1.msra.mxu0 0.0
  %120 = vmatprep.mubr.f32.mxu0 0.0
  %121 = vmatmul.mubr.f32.gmra.mrb[0].mxu0 %v54
  %v122 = vpop.f32.mrb[0].mxu0
  %v123 = vadd.f32 0.0, %v122
  %v124 = vpop.f32.mrb[0].mxu0
  %125 = vdwg.mxu0
  %v126 = vlaneseq
  %v127 = vshrl.u32 %v126, 7
  %v128 = vadd.s32 %v127, 8
  %v129 = vadd.s32 %v127, 16
  %v130 = vadd.s32 %v127, 24
  %v131 = vadd.s32 %v127, 32
  %v132 = vadd.s32 %v127, 40
  %v133 = vadd.s32 %v127, 48
  %v134 = vadd.s32 %v127, 56
  %v135 = vlaneseq
  %v136 = vand.u32 %v135, 127
  %vm137 = vcmp.eq.s32.totalorder %v127, %v136
  %vm138 = vcmp.eq.s32.totalorder %v128, %v136
  %vm139 = vcmp.eq.s32.totalorder %v129, %v136
  %vm140 = vcmp.eq.s32.totalorder %v130, %v136
  %vm141 = vcmp.eq.s32.totalorder %v131, %v136
  %vm142 = vcmp.eq.s32.totalorder %v132, %v136
  %vm143 = vcmp.eq.s32.totalorder %v133, %v136
  %vm144 = vcmp.eq.s32.totalorder %v134, %v136
  %v145 = vsel %vm137, 1, 0
  %v146 = vsel %vm138, 1, 0
  %v147 = vsel %vm139, 1, 0
  %v148 = vsel %vm140, 1, 0
  %v149 = vsel %vm141, 1, 0
  %v150 = vsel %vm142, 1, 0
  %v151 = vsel %vm143, 1, 0
  %v152 = vsel %vm144, 1, 0
  %v153 = vcvt.s32.f32 %v145
  %v154 = vcvt.s32.f32 %v146
  %v155 = vcvt.s32.f32 %v147
  %v156 = vcvt.s32.f32 %v148
  %v157 = vcvt.s32.f32 %v149
  %v158 = vcvt.s32.f32 %v150
  %v159 = vcvt.s32.f32 %v151
  %v160 = vcvt.s32.f32 %v152
  %v161 = vlaneseq
  %v162 = vshrl.u32 %v161, 7
  %v163 = vsub.s32 0, %v162
  %v164 = vrot.slane %v123, %v163
  %v165 = vmul.f32 %v153, %v164
  %v166 = vmul.f32 %v154, %v164
  %v167 = vmul.f32 %v155, %v164
  %v168 = vmul.f32 %v156, %v164
  %v169 = vmul.f32 %v157, %v164
  %v170 = vmul.f32 %v158, %v164
  %v171 = vmul.f32 %v159, %v164
  %v172 = vmul.f32 %v160, %v164
  %v173 = vsel %vm28, %v165, 0.0
  %174 = vadd.xlane.f32.xlu0 %v173
  %v175 = vpop.xlane.xlu0 %174
  %v176 = vsel %vm28, %v166, 0.0
  %177 = vadd.xlane.f32.xlu0 %v176
  %v178 = vpop.xlane.xlu0 %177
  %v179 = vsel %vm28, %v167, 0.0
  %180 = vadd.xlane.f32.xlu0 %v179
  %v181 = vpop.xlane.xlu0 %180
  %v182 = vsel %vm28, %v168, 0.0
  %183 = vadd.xlane.f32.xlu0 %v182
  %v184 = vpop.xlane.xlu0 %183
  %v185 = vsel %vm28, %v169, 0.0
  %186 = vadd.xlane.f32.xlu0 %v185
  %v187 = vpop.xlane.xlu0 %186
  %v188 = vsel %vm28, %v170, 0.0
  %189 = vadd.xlane.f32.xlu0 %v188
  %v190 = vpop.xlane.xlu0 %189
  %v191 = vsel %vm28, %v171, 0.0
  %192 = vadd.xlane.f32.xlu0 %v191
  %v193 = vpop.xlane.xlu0 %192
  %v194 = vsel %vm28, %v172, 0.0
  %195 = vadd.xlane.f32.xlu0 %v194
  %v196 = vpop.xlane.xlu0 %195
  %v197 = vmax.f32 %v31, 1.0
  %v198 = vmax.f32 %v34, 1.0
  %v199 = vmax.f32 %v37, 1.0
  %v200 = vmax.f32 %v40, 1.0
  %v201 = vmax.f32 %v43, 1.0
  %v202 = vmax.f32 %v46, 1.0
  %v203 = vmax.f32 %v49, 1.0
  %v204 = vmax.f32 %v52, 1.0
  %v205 = vrsqrt.pop %v197
  %v206 = vrsqrt.pop %v198
  %v207 = vrsqrt.pop %v199
  %v208 = vrsqrt.pop %v200
  %v209 = vrsqrt.pop %v201
  %v210 = vrsqrt.pop %v202
  %v211 = vrsqrt.pop %v203
  %v212 = vrsqrt.pop %v204
  %v213 = vmax.f32 %v175, 1.0
  %v214 = vmax.f32 %v178, 1.0
  %v215 = vmax.f32 %v181, 1.0
  %v216 = vmax.f32 %v184, 1.0
  %v217 = vmax.f32 %v187, 1.0
  %v218 = vmax.f32 %v190, 1.0
  %v219 = vmax.f32 %v193, 1.0
  %v220 = vmax.f32 %v196, 1.0
  %v221 = vrsqrt.pop %v213
  %v222 = vrsqrt.pop %v214
  %v223 = vrsqrt.pop %v215
  %v224 = vrsqrt.pop %v216
  %v225 = vrsqrt.pop %v217
  %v226 = vrsqrt.pop %v218
  %v227 = vrsqrt.pop %v219
  %v228 = vrsqrt.pop %v220
  %v229 = vadd.f32 %v31, %v175
  %v230 = vadd.f32 %v34, %v178
  %v231 = vadd.f32 %v37, %v181
  %v232 = vadd.f32 %v40, %v184
  %v233 = vadd.f32 %v43, %v187
  %v234 = vadd.f32 %v46, %v190
  %v235 = vadd.f32 %v49, %v193
  %v236 = vadd.f32 %v52, %v196
  %v237 = vcvt.f32.s32.to.zero.pseudo %v229
  %v238 = vcvt.f32.s32.to.zero.pseudo %v230
  %v239 = vcvt.f32.s32.to.zero.pseudo %v231
  %v240 = vcvt.f32.s32.to.zero.pseudo %v232
  %v241 = vcvt.f32.s32.to.zero.pseudo %v233
  %v242 = vcvt.f32.s32.to.zero.pseudo %v234
  %v243 = vcvt.f32.s32.to.zero.pseudo %v235
  %v244 = vcvt.f32.s32.to.zero.pseudo %v236
  %vm245 = vcmp.gt.s32.totalorder %v237, 0
  %v246 = vsel %vm245, %v237, 0
  %vm247 = vcmp.gt.s32.totalorder %v238, 0
  %v248 = vsel %vm247, %v238, 0
  %vm249 = vcmp.gt.s32.totalorder %v239, 0
  %v250 = vsel %vm249, %v239, 0
  %vm251 = vcmp.gt.s32.totalorder %v240, 0
  %v252 = vsel %vm251, %v240, 0
  %vm253 = vcmp.gt.s32.totalorder %v241, 0
  %v254 = vsel %vm253, %v241, 0
  %vm255 = vcmp.gt.s32.totalorder %v242, 0
  %v256 = vsel %vm255, %v242, 0
  %vm257 = vcmp.gt.s32.totalorder %v243, 0
  %v258 = vsel %vm257, %v243, 0
  %vm259 = vcmp.gt.s32.totalorder %v244, 0
  %v260 = vsel %vm259, %v244, 0
  %vm261 = vcmp.lt.s32.totalorder %v246, 127
  %v262 = vsel %vm261, %v246, 127
  %vm263 = vcmp.lt.s32.totalorder %v248, 127
  %v264 = vsel %vm263, %v248, 127
  %vm265 = vcmp.lt.s32.totalorder %v250, 127
  %v266 = vsel %vm265, %v250, 127
  %vm267 = vcmp.lt.s32.totalorder %v252, 127
  %v268 = vsel %vm267, %v252, 127
  %vm269 = vcmp.lt.s32.totalorder %v254, 127
  %v270 = vsel %vm269, %v254, 127
  %vm271 = vcmp.lt.s32.totalorder %v256, 127
  %v272 = vsel %vm271, %v256, 127
  %vm273 = vcmp.lt.s32.totalorder %v258, 127
  %v274 = vsel %vm273, %v258, 127
  %vm275 = vcmp.lt.s32.totalorder %v260, 127
  %v276 = vsel %vm275, %v260, 127
  %vm277 = vcmp.eq.s32.totalorder %v136, %v262
  %vm278 = vcmp.eq.s32.totalorder %v136, %v264
  %vm279 = vcmp.eq.s32.totalorder %v136, %v266
  %vm280 = vcmp.eq.s32.totalorder %v136, %v268
  %vm281 = vcmp.eq.s32.totalorder %v136, %v270
  %vm282 = vcmp.eq.s32.totalorder %v136, %v272
  %vm283 = vcmp.eq.s32.totalorder %v136, %v274
  %vm284 = vcmp.eq.s32.totalorder %v136, %v276
  %v285 = vsel %vm277, 1, 0
  %v286 = vsel %vm278, 1, 0
  %v287 = vsel %vm279, 1, 0
  %v288 = vsel %vm280, 1, 0
  %v289 = vsel %vm281, 1, 0
  %v290 = vsel %vm282, 1, 0
  %v291 = vsel %vm283, 1, 0
  %v292 = vsel %vm284, 1, 0
  %v293 = vcvt.s32.f32 %v285
  %v294 = vcvt.s32.f32 %v286
  %v295 = vcvt.s32.f32 %v287
  %v296 = vcvt.s32.f32 %v288
  %v297 = vcvt.s32.f32 %v289
  %v298 = vcvt.s32.f32 %v290
  %v299 = vcvt.s32.f32 %v291
  %v300 = vcvt.s32.f32 %v292
  %v301 = vld [vmem:[%s3] sm:$0xf]
  %v302 = vld [vmem:[%s3 + $0x8] sm:$0xff]
  %v303 = vld [vmem:[%s3 + $0x10] sm:$0xff]
  %v304 = vld [vmem:[%s3 + $0x18] sm:$0xff]
  %v305 = vld [vmem:[%s3 + $0x20] sm:$0xff]
  %v306 = vld [vmem:[%s3 + $0x28] sm:$0xff]
  %v307 = vld [vmem:[%s3 + $0x30] sm:$0xff]
  %v308 = vld [vmem:[%s3 + $0x38] sm:$0xff]
  %v309 = vld [vmem:[%s3 + $0x40] sm:$0xff]
  %v310 = vld [vmem:[%s3 + $0x48] sm:$0xff]
  %v311 = vld [vmem:[%s3 + $0x50] sm:$0xff]
  %v312 = vld [vmem:[%s3 + $0x58] sm:$0xff]
  %v313 = vld [vmem:[%s3 + $0x60] sm:$0xff]
  %v314 = vld [vmem:[%s3 + $0x68] sm:$0xff]
  %v315 = vld [vmem:[%s3 + $0x70] sm:$0xff]
  %v316 = vld [vmem:[%s3 + $0x78] sm:$0xff]
  %v317 = vld [vmem:[%s3 + $0x80] sm:$0xff]
  %v318 = vld [vmem:[%s3 + $0x88] sm:$0xff]
  %v319 = vld [vmem:[%s3 + $0x90] sm:$0xff]
  %v320 = vld [vmem:[%s3 + $0x98] sm:$0x1]
  %v321 = vld [vmem:[%s4] sm:$0xff]
  %v322 = vld [vmem:[%s4 + $0x8] sm:$0xff]
  %v323 = vld [vmem:[%s4 + $0x10] sm:$0xff]
  %v324 = vld [vmem:[%s4 + $0x18] sm:$0xff]
  %v325 = vld [vmem:[%s4 + $0x20] sm:$0x1]
  %v326 = vld [vmem:[%s1] sm:$0xff]
  %v327 = vld [vmem:[%s1 + $0x8] sm:$0xff]
  %v328 = vld [vmem:[%s1 + $0x10] sm:$0xff]
  %v329 = vld [vmem:[%s1 + $0x18] sm:$0xff]
  %v330 = vld [vmem:[%s1 + $0x20] sm:$0xff]
  %v331 = vld [vmem:[%s1 + $0x28] sm:$0xff]
  %v332 = vld [vmem:[%s1 + $0x30] sm:$0xff]
  %v333 = vld [vmem:[%s1 + $0x38] sm:$0xff]
  %v334 = vld [vmem:[%s2] sm:$0xff]
  %v335 = vld [vmem:[%s2 + $0x8] sm:$0xff]
  %v336 = vld [vmem:[%s2 + $0x10] sm:$0xff]
  %v337 = vld [vmem:[%s2 + $0x18] sm:$0xff]
  %v338 = vld [vmem:[%s2 + $0x20] sm:$0xff]
  %v339 = vld [vmem:[%s2 + $0x28] sm:$0xff]
  %v340 = vld [vmem:[%s2 + $0x30] sm:$0xff]
  %v341 = vld [vmem:[%s2 + $0x38] sm:$0xff]
  %vm342 = vcmask 130048
  %v344 = vsel %vm342, %v334, 0
  %v347 = vsel %vm342, %v335, 0
  %v350 = vsel %vm342, %v336, 0
  %v353 = vsel %vm342, %v337, 0
  %v356 = vsel %vm342, %v338, 0
  %v359 = vsel %vm342, %v339, 0
  %v362 = vsel %vm342, %v340, 0
  %v365 = vsel %vm342, %v341, 0
  %367 = vmatprep.subr.mxu0 0.0
  %368 = vmatpush1.msra.mxu0 %v302
  %369 = vmatprep.subr.mxu0 0.0
  %370 = vmatpush1.msra.mxu0 %v303
  %371 = vmatprep.subr.mxu0 0.0
  %372 = vmatpush1.msra.mxu0 0.0
  %373 = vmatprep.subr.mxu0 0.0
  %374 = vmatpush1.msra.mxu0 0.0
  %375 = vmatprep.subr.mxu0 0.0
  %376 = vmatpush1.msra.mxu0 0.0
  %377 = vmatprep.subr.mxu0 0.0
  %378 = vmatpush1.msra.mxu0 0.0
  %379 = vmatprep.subr.mxu0 0.0
  %380 = vmatpush1.msra.mxu0 0.0
  %381 = vmatprep.subr.mxu0 0.0
  %382 = vmatpush1.msra.mxu0 0.0
  %383 = vmatprep.subr.mxu0 0.0
  %384 = vmatpush1.msra.mxu0 0.0
  %385 = vmatprep.subr.mxu0 0.0
  %386 = vmatpush1.msra.mxu0 0.0
  %387 = vmatprep.subr.mxu0 0.0
  %388 = vmatpush1.msra.mxu0 0.0
  %389 = vmatprep.subr.mxu0 0.0
  %390 = vmatpush1.msra.mxu0 0.0
  %391 = vmatprep.subr.mxu0 0.0
  %392 = vmatpush1.msra.mxu0 0.0
  %393 = vmatprep.subr.mxu0 0.0
  %394 = vmatpush1.msra.mxu0 0.0
  %395 = vmatprep.subr.mxu0 0.0
  %396 = vmatpush1.msra.mxu0 0.0
  %397 = vmatprep.subr.mxu0 0.0
  %398 = vmatpush1.msra.mxu0 0.0
  %399 = vmatprep.subr.mxu0 0.0
  %400 = vmatpush1.msra.mxu0 0.0
  %401 = vmatprep.subr.mxu0 0.0
  %402 = vmatpush1.msra.mxu0 0.0
  %403 = vmatprep.subr.mxu0 0.0
  %404 = vmatpush1.msra.mxu0 0.0
  %405 = vmatprep.subr.mxu0 0.0
  %406 = vmatpush1.msra.mxu0 0.0
  %407 = vmatprep.subr.mxu0 0.0
  %408 = vmatpush1.msra.mxu0 0.0
  %409 = vmatprep.subr.mxu0 0.0
  %410 = vmatpush1.msra.mxu0 0.0
  %411 = vmatprep.subr.mxu0 0.0
  %412 = vmatpush1.msra.mxu0 0.0
  %413 = vmatprep.subr.mxu0 0.0
  %414 = vmatpush1.msra.mxu0 0.0
  %415 = vmatprep.subr.mxu0 0.0
  %416 = vmatpush1.msra.mxu0 0.0
  %417 = vmatprep.subr.mxu0 0.0
  %418 = vmatpush1.msra.mxu0 0.0
  %419 = vmatprep.subr.mxu0 0.0
  %420 = vmatpush1.msra.mxu0 0.0
  %421 = vmatprep.subr.mxu0 0.0
  %422 = vmatpush1.msra.mxu0 0.0
  %423 = vmatprep.subr.mxu0 0.0
  %424 = vmatpush1.msra.mxu0 0.0
  %425 = vmatprep.subr.mxu0 0.0
  %426 = vmatpush1.msra.mxu0 0.0
  %427 = vmatprep.subr.mxu0 0.0
  %428 = vmatpush1.msra.mxu0 0.0
  %429 = vmatprep.subr.mxu0 0.0
  %430 = vmatpush1.msra.mxu0 0.0
  %431 = vmatprep.mubr.f32.mxu0 0.0
  %432 = vmatmul.mubr.f32.gmra.mrb[0].mxu0 %v344
  %v433 = vpop.f32.mrb[0].mxu0
  %v434 = vadd.f32 0.0, %v433
  %v435 = vpop.f32.mrb[0].mxu0
  %436 = vmatprep.mubr.f32.mxu0 0.0
  %437 = vmatmul.mubr.f32.gmra.mrb[0].mxu0 %v347
  %v438 = vpop.f32.mrb[0].mxu0
  %v439 = vadd.f32 0.0, %v438
  %v440 = vpop.f32.mrb[0].mxu0
  %441 = vmatprep.mubr.f32.mxu0 0.0
  %442 = vmatmul.mubr.f32.gmra.mrb[0].mxu0 %v350
  %v443 = vpop.f32.mrb[0].mxu0
  %v444 = vadd.f32 0.0, %v443
  %v445 = vpop.f32.mrb[0].mxu0
  %446 = vmatprep.mubr.f32.mxu0 0.0
  %447 = vmatmul.mubr.f32.gmra.mrb[0].mxu0 %v353
  %v448 = vpop.f32.mrb[0].mxu0
  %v449 = vadd.f32 0.0, %v448
  %v450 = vpop.f32.mrb[0].mxu0
  %451 = vmatprep.mubr.f32.mxu0 0.0
  %452 = vmatmul.mubr.f32.gmra.mrb[0].mxu0 %v356
  %v453 = vpop.f32.mrb[0].mxu0
  %v454 = vadd.f32 0.0, %v453
  %v455 = vpop.f32.mrb[0].mxu0
  %456 = vmatprep.mubr.f32.mxu0 0.0
  %457 = vmatmul.mubr.f32.gmra.mrb[0].mxu0 %v359
  %v458 = vpop.f32.mrb[0].mxu0
  %v459 = vadd.f32 0.0, %v458
  %v460 = vpop.f32.mrb[0].mxu0
  %461 = vmatprep.mubr.f32.mxu0 0.0
  %462 = vmatmul.mubr.f32.gmra.mrb[0].mxu0 %v362
  %v463 = vpop.f32.mrb[0].mxu0
  %v464 = vadd.f32 0.0, %v463
  %v465 = vpop.f32.mrb[0].mxu0
  %466 = vmatprep.mubr.f32.mxu0 0.0
  %467 = vmatmul.mubr.f32.gmra.mrb[0].mxu0 %v365
  %v468 = vpop.f32.mrb[0].mxu0
  %v469 = vadd.f32 0.0, %v468
  %v470 = vpop.f32.mrb[0].mxu0
  %471 = vdwg.mxu0
  %vm472 = vcmask 31744
  %v474 = vsel %vm472, %v326, 0
  %v477 = vsel %vm472, %v327, 0
  %v480 = vsel %vm472, %v328, 0
  %v483 = vsel %vm472, %v329, 0
  %v486 = vsel %vm472, %v330, 0
  %v489 = vsel %vm472, %v331, 0
  %v492 = vsel %vm472, %v332, 0
  %v495 = vsel %vm472, %v333, 0
  %vm497 = vcmask 1043456
  %v499 = vsel %vm497, %v301, 0
  %501 = vmatprep.subr.mxu0 0.0
  %502 = vmatpush1.msra.mxu0 %v499
  %503 = vmatprep.subr.mxu0 0.0
  %504 = vmatpush1.msra.mxu0 0.0
  %505 = vmatprep.subr.mxu0 0.0
  %506 = vmatpush1.msra.mxu0 0.0
  %507 = vmatprep.subr.mxu0 0.0
  %508 = vmatpush1.msra.mxu0 0.0
  %509 = vmatprep.subr.mxu0 0.0
  %510 = vmatpush1.msra.mxu0 0.0
  %511 = vmatprep.subr.mxu0 0.0
  %512 = vmatpush1.msra.mxu0 0.0
  %513 = vmatprep.subr.mxu0 0.0
  %514 = vmatpush1.msra.mxu0 0.0
  %515 = vmatprep.subr.mxu0 0.0
  %516 = vmatpush1.msra.mxu0 0.0
  %517 = vmatprep.subr.mxu0 0.0
  %518 = vmatpush1.msra.mxu0 0.0
  %519 = vmatprep.subr.mxu0 0.0
  %520 = vmatpush1.msra.mxu0 0.0
  %521 = vmatprep.subr.mxu0 0.0
  %522 = vmatpush1.msra.mxu0 0.0
  %523 = vmatprep.subr.mxu0 0.0
  %524 = vmatpush1.msra.mxu0 0.0
  %525 = vmatprep.subr.mxu0 0.0
  %526 = vmatpush1.msra.mxu0 0.0
  %527 = vmatprep.subr.mxu0 0.0
  %528 = vmatpush1.msra.mxu0 0.0
  %529 = vmatprep.subr.mxu0 0.0
  %530 = vmatpush1.msra.mxu0 0.0
  %531 = vmatprep.subr.mxu0 0.0
  %532 = vmatpush1.msra.mxu0 0.0
  %533 = vmatprep.subr.mxu0 0.0
  %534 = vmatpush1.msra.mxu0 0.0
  %535 = vmatprep.subr.mxu0 0.0
  %536 = vmatpush1.msra.mxu0 0.0
  %537 = vmatprep.subr.mxu0 0.0
  %538 = vmatpush1.msra.mxu0 0.0
  %539 = vmatprep.subr.mxu0 0.0
  %540 = vmatpush1.msra.mxu0 0.0
  %541 = vmatprep.subr.mxu0 0.0
  %542 = vmatpush1.msra.mxu0 0.0
  %543 = vmatprep.subr.mxu0 0.0
  %544 = vmatpush1.msra.mxu0 0.0
  %545 = vmatprep.subr.mxu0 0.0
  %546 = vmatpush1.msra.mxu0 0.0
  %547 = vmatprep.subr.mxu0 0.0
  %548 = vmatpush1.msra.mxu0 0.0
  %549 = vmatprep.subr.mxu0 0.0
  %550 = vmatpush1.msra.mxu0 0.0
  %551 = vmatprep.subr.mxu0 0.0
  %552 = vmatpush1.msra.mxu0 0.0
  %553 = vmatprep.subr.mxu0 0.0
  %554 = vmatpush1.msra.mxu0 0.0
  %555 = vmatprep.subr.mxu0 0.0
  %556 = vmatpush1.msra.mxu0 0.0
  %557 = vmatprep.subr.mxu0 0.0
  %558 = vmatpush1.msra.mxu0 0.0
  %559 = vmatprep.subr.mxu0 0.0
  %560 = vmatpush1.msra.mxu0 0.0
  %561 = vmatprep.subr.mxu0 0.0
  %562 = vmatpush1.msra.mxu0 0.0
  %563 = vmatprep.subr.mxu0 0.0
  %564 = vmatpush1.msra.mxu0 0.0
  %565 = vmatprep.mubr.f32.mxu0 0.0
  %566 = vmatmul.mubr.f32.gmra.mrb[0].mxu0 %v474
  %v567 = vpop.f32.mrb[0].mxu0
  %v568 = vadd.f32 %v434, %v567
  %v569 = vpop.f32.mrb[0].mxu0
  %570 = vmatprep.mubr.f32.mxu0 0.0
  %571 = vmatmul.mubr.f32.gmra.mrb[0].mxu0 %v477
  %v572 = vpop.f32.mrb[0].mxu0
  %v573 = vadd.f32 %v439, %v572
  %v574 = vpop.f32.mrb[0].mxu0
  %575 = vmatprep.mubr.f32.mxu0 0.0
  %576 = vmatmul.mubr.f32.gmra.mrb[0].mxu0 %v480
  %v577 = vpop.f32.mrb[0].mxu0
  %v578 = vadd.f32 %v444, %v577
  %v579 = vpop.f32.mrb[0].mxu0
  %580 = vmatprep.mubr.f32.mxu0 0.0
  %581 = vmatmul.mubr.f32.gmra.mrb[0].mxu0 %v483
  %v582 = vpop.f32.mrb[0].mxu0
  %v583 = vadd.f32 %v449, %v582
  %v584 = vpop.f32.mrb[0].mxu0
  %585 = vmatprep.mubr.f32.mxu0 0.0
  %586 = vmatmul.mubr.f32.gmra.mrb[0].mxu0 %v486
  %v587 = vpop.f32.mrb[0].mxu0
  %v588 = vadd.f32 %v454, %v587
  %v589 = vpop.f32.mrb[0].mxu0
  %590 = vmatprep.mubr.f32.mxu0 0.0
  %591 = vmatmul.mubr.f32.gmra.mrb[0].mxu0 %v489
  %v592 = vpop.f32.mrb[0].mxu0
  %v593 = vadd.f32 %v459, %v592
  %v594 = vpop.f32.mrb[0].mxu0
  %595 = vmatprep.mubr.f32.mxu0 0.0
  %596 = vmatmul.mubr.f32.gmra.mrb[0].mxu0 %v492
  %v597 = vpop.f32.mrb[0].mxu0
  %v598 = vadd.f32 %v464, %v597
  %v599 = vpop.f32.mrb[0].mxu0
  %600 = vmatprep.mubr.f32.mxu0 0.0
  %601 = vmatmul.mubr.f32.gmra.mrb[0].mxu0 %v495
  %v602 = vpop.f32.mrb[0].mxu0
  %v603 = vadd.f32 %v469, %v602
  %v604 = vpop.f32.mrb[0].mxu0
  %605 = vdwg.mxu0
  %606 = vmatprep.subr.mxu0 0.0
  %607 = vmatpush1.msra.mxu0 %v304
  %608 = vmatprep.subr.mxu0 0.0
  %609 = vmatpush1.msra.mxu0 %v305
  %610 = vmatprep.subr.mxu0 0.0
  %611 = vmatpush1.msra.mxu0 %v306
  %612 = vmatprep.subr.mxu0 0.0
  %613 = vmatpush1.msra.mxu0 %v307
  %614 = vmatprep.subr.mxu0 0.0
  %615 = vmatpush1.msra.mxu0 %v308
  %616 = vmatprep.subr.mxu0 0.0
  %617 = vmatpush1.msra.mxu0 %v309
  %618 = vmatprep.subr.mxu0 0.0
  %619 = vmatpush1.msra.mxu0 %v310
  %620 = vmatprep.subr.mxu0 0.0
  %621 = vmatpush1.msra.mxu0 %v311
  %622 = vmatprep.subr.mxu0 0.0
  %623 = vmatpush1.msra.mxu0 %v312
  %624 = vmatprep.subr.mxu0 0.0
  %625 = vmatpush1.msra.mxu0 %v313
  %626 = vmatprep.subr.mxu0 0.0
  %627 = vmatpush1.msra.mxu0 %v314
  %628 = vmatprep.subr.mxu0 0.0
  %629 = vmatpush1.msra.mxu0 %v315
  %630 = vmatprep.subr.mxu0 0.0
  %631 = vmatpush1.msra.mxu0 %v316
  %632 = vmatprep.subr.mxu0 0.0
  %633 = vmatpush1.msra.mxu0 %v317
  %634 = vmatprep.subr.mxu0 0.0
  %635 = vmatpush1.msra.mxu0 %v318
  %636 = vmatprep.subr.mxu0 0.0
  %637 = vmatpush1.msra.mxu0 %v319
  %638 = vmatprep.subr.mxu0 0.0
  %639 = vmatpush1.msra.mxu0 0.0
  %640 = vmatprep.subr.mxu0 0.0
  %641 = vmatpush1.msra.mxu0 0.0
  %642 = vmatprep.subr.mxu0 0.0
  %643 = vmatpush1.msra.mxu0 0.0
  %644 = vmatprep.subr.mxu0 0.0
  %645 = vmatpush1.msra.mxu0 0.0
  %646 = vmatprep.subr.mxu0 0.0
  %647 = vmatpush1.msra.mxu0 0.0
  %648 = vmatprep.subr.mxu0 0.0
  %649 = vmatpush1.msra.mxu0 0.0
  %650 = vmatprep.subr.mxu0 0.0
  %651 = vmatpush1.msra.mxu0 0.0
  %652 = vmatprep.subr.mxu0 0.0
  %653 = vmatpush1.msra.mxu0 0.0
  %654 = vmatprep.subr.mxu0 0.0
  %655 = vmatpush1.msra.mxu0 0.0
  %656 = vmatprep.subr.mxu0 0.0
  %657 = vmatpush1.msra.mxu0 0.0
  %658 = vmatprep.subr.mxu0 0.0
  %659 = vmatpush1.msra.mxu0 0.0
  %660 = vmatprep.subr.mxu0 0.0
  %661 = vmatpush1.msra.mxu0 0.0
  %662 = vmatprep.subr.mxu0 0.0
  %663 = vmatpush1.msra.mxu0 0.0
  %664 = vmatprep.subr.mxu0 0.0
  %665 = vmatpush1.msra.mxu0 0.0
  %666 = vmatprep.subr.mxu0 0.0
  %667 = vmatpush1.msra.mxu0 0.0
  %668 = vmatprep.subr.mxu0 0.0
  %669 = vmatpush1.msra.mxu0 0.0
  %670 = vmatprep.mubr.f32.mxu0 0.0
  %671 = vmatmul.mubr.f32.gmra.mrb[0].mxu0 %v293
  %v672 = vpop.f32.mrb[0].mxu0
  %v673 = vadd.f32 0.0, %v672
  %v674 = vpop.f32.mrb[0].mxu0
  %675 = vmatprep.mubr.f32.mxu0 0.0
  %676 = vmatmul.mubr.f32.gmra.mrb[0].mxu0 %v294
  %v677 = vpop.f32.mrb[0].mxu0
  %v678 = vadd.f32 0.0, %v677
  %v679 = vpop.f32.mrb[0].mxu0
  %680 = vmatprep.mubr.f32.mxu0 0.0
  %681 = vmatmul.mubr.f32.gmra.mrb[0].mxu0 %v295
  %v682 = vpop.f32.mrb[0].mxu0
  %v683 = vadd.f32 0.0, %v682
  %v684 = vpop.f32.mrb[0].mxu0
  %685 = vmatprep.mubr.f32.mxu0 0.0
  %686 = vmatmul.mubr.f32.gmra.mrb[0].mxu0 %v296
  %v687 = vpop.f32.mrb[0].mxu0
  %v688 = vadd.f32 0.0, %v687
  %v689 = vpop.f32.mrb[0].mxu0
  %690 = vmatprep.mubr.f32.mxu0 0.0
  %691 = vmatmul.mubr.f32.gmra.mrb[0].mxu0 %v297
  %v692 = vpop.f32.mrb[0].mxu0
  %v693 = vadd.f32 0.0, %v692
  %v694 = vpop.f32.mrb[0].mxu0
  %695 = vmatprep.mubr.f32.mxu0 0.0
  %696 = vmatmul.mubr.f32.gmra.mrb[0].mxu0 %v298
  %v697 = vpop.f32.mrb[0].mxu0
  %v698 = vadd.f32 0.0, %v697
  %v699 = vpop.f32.mrb[0].mxu0
  %700 = vmatprep.mubr.f32.mxu0 0.0
  %701 = vmatmul.mubr.f32.gmra.mrb[0].mxu0 %v299
  %v702 = vpop.f32.mrb[0].mxu0
  %v703 = vadd.f32 0.0, %v702
  %v704 = vpop.f32.mrb[0].mxu0
  %705 = vmatprep.mubr.f32.mxu0 0.0
  %706 = vmatmul.mubr.f32.gmra.mrb[0].mxu0 %v300
  %v707 = vpop.f32.mrb[0].mxu0
  %v708 = vadd.f32 0.0, %v707
  %v709 = vpop.f32.mrb[0].mxu0
  %710 = vdwg.mxu0
  %v711 = vadd.f32 %v568, %v673
  %v712 = vadd.f32 %v573, %v678
  %v713 = vadd.f32 %v578, %v683
  %v714 = vadd.f32 %v583, %v688
  %v715 = vadd.f32 %v588, %v693
  %v716 = vadd.f32 %v593, %v698
  %v717 = vadd.f32 %v598, %v703
  %v718 = vadd.f32 %v603, %v708
  %v719 = vmul.f32 %v221, %v711
  %v720 = vmul.f32 %v222, %v712
  %v721 = vmul.f32 %v223, %v713
  %v722 = vmul.f32 %v224, %v714
  %v723 = vmul.f32 %v225, %v715
  %v724 = vmul.f32 %v226, %v716
  %v725 = vmul.f32 %v227, %v717
  %v726 = vmul.f32 %v228, %v718
  %v728 = vsel %vm28, %v20, 0
  %v731 = vsel %vm28, %v21, 0
  %v734 = vsel %vm28, %v22, 0
  %v737 = vsel %vm28, %v23, 0
  %v740 = vsel %vm28, %v24, 0
  %v743 = vsel %vm28, %v25, 0
  %v746 = vsel %vm28, %v26, 0
  %v749 = vsel %vm28, %v27, 0
  %751 = vmatprep.subr.mxu0 0.0
  %752 = vmatpush1.msra.mxu0 %v719
  %753 = vmatprep.subr.mxu0 0.0
  %754 = vmatpush1.msra.mxu0 %v720
  %755 = vmatprep.subr.mxu0 0.0
  %756 = vmatpush1.msra.mxu0 %v721
  %757 = vmatprep.subr.mxu0 0.0
  %758 = vmatpush1.msra.mxu0 %v722
  %759 = vmatprep.subr.mxu0 0.0
  %760 = vmatpush1.msra.mxu0 %v723
  %761 = vmatprep.subr.mxu0 0.0
  %762 = vmatpush1.msra.mxu0 %v724
  %763 = vmatprep.subr.mxu0 0.0
  %764 = vmatpush1.msra.mxu0 %v725
  %765 = vmatprep.subr.mxu0 0.0
  %766 = vmatpush1.msra.mxu0 %v726
  %767 = vmatprep.subr.mxu0 0.0
  %768 = vmatpush1.msra.mxu0 0.0
  %769 = vmatprep.subr.mxu0 0.0
  %770 = vmatpush1.msra.mxu0 0.0
  %771 = vmatprep.subr.mxu0 0.0
  %772 = vmatpush1.msra.mxu0 0.0
  %773 = vmatprep.subr.mxu0 0.0
  %774 = vmatpush1.msra.mxu0 0.0
  %775 = vmatprep.subr.mxu0 0.0
  %776 = vmatpush1.msra.mxu0 0.0
  %777 = vmatprep.subr.mxu0 0.0
  %778 = vmatpush1.msra.mxu0 0.0
  %779 = vmatprep.subr.mxu0 0.0
  %780 = vmatpush1.msra.mxu0 0.0
  %781 = vmatprep.subr.mxu0 0.0
  %782 = vmatpush1.msra.mxu0 0.0
  %783 = vmatprep.subr.mxu0 0.0
  %784 = vmatpush1.msra.mxu0 0.0
  %785 = vmatprep.subr.mxu0 0.0
  %786 = vmatpush1.msra.mxu0 0.0
  %787 = vmatprep.subr.mxu0 0.0
  %788 = vmatpush1.msra.mxu0 0.0
  %789 = vmatprep.subr.mxu0 0.0
  %790 = vmatpush1.msra.mxu0 0.0
  %791 = vmatprep.subr.mxu0 0.0
  %792 = vmatpush1.msra.mxu0 0.0
  %793 = vmatprep.subr.mxu0 0.0
  %794 = vmatpush1.msra.mxu0 0.0
  %795 = vmatprep.subr.mxu0 0.0
  %796 = vmatpush1.msra.mxu0 0.0
  %797 = vmatprep.subr.mxu0 0.0
  %798 = vmatpush1.msra.mxu0 0.0
  %799 = vmatprep.subr.mxu0 0.0
  %800 = vmatpush1.msra.mxu0 0.0
  %801 = vmatprep.subr.mxu0 0.0
  %802 = vmatpush1.msra.mxu0 0.0
  %803 = vmatprep.subr.mxu0 0.0
  %804 = vmatpush1.msra.mxu0 0.0
  %805 = vmatprep.subr.mxu0 0.0
  %806 = vmatpush1.msra.mxu0 0.0
  %807 = vmatprep.subr.mxu0 0.0
  %808 = vmatpush1.msra.mxu0 0.0
  %809 = vmatprep.subr.mxu0 0.0
  %810 = vmatpush1.msra.mxu0 0.0
  %811 = vmatprep.subr.mxu0 0.0
  %812 = vmatpush1.msra.mxu0 0.0
  %813 = vmatprep.subr.mxu0 0.0
  %814 = vmatpush1.msra.mxu0 0.0
  %815 = vmatprep.mubr.f32.mxu0 0.0
  %816 = vmatmul.mubr.f32.gmra.mrb[0].mxu0 %v728
  %v817 = vpop.f32.mrb[0].mxu0
  %v818 = vadd.f32 0.0, %v817
  %v819 = vpop.f32.mrb[0].mxu0
  %820 = vmatprep.mubr.f32.mxu0 0.0
  %821 = vmatmul.mubr.f32.gmra.mrb[0].mxu0 %v731
  %v822 = vpop.f32.mrb[0].mxu0
  %v823 = vadd.f32 0.0, %v822
  %v824 = vpop.f32.mrb[0].mxu0
  %825 = vmatprep.mubr.f32.mxu0 0.0
  %826 = vmatmul.mubr.f32.gmra.mrb[0].mxu0 %v734
  %v827 = vpop.f32.mrb[0].mxu0
  %v828 = vadd.f32 0.0, %v827
  %v829 = vpop.f32.mrb[0].mxu0
  %830 = vmatprep.mubr.f32.mxu0 0.0
  %831 = vmatmul.mubr.f32.gmra.mrb[0].mxu0 %v737
  %v832 = vpop.f32.mrb[0].mxu0
  %v833 = vadd.f32 0.0, %v832
  %v834 = vpop.f32.mrb[0].mxu0
  %835 = vmatprep.mubr.f32.mxu0 0.0
  %836 = vmatmul.mubr.f32.gmra.mrb[0].mxu0 %v740
  %v837 = vpop.f32.mrb[0].mxu0
  %v838 = vadd.f32 0.0, %v837
  %v839 = vpop.f32.mrb[0].mxu0
  %840 = vmatprep.mubr.f32.mxu0 0.0
  %841 = vmatmul.mubr.f32.gmra.mrb[0].mxu0 %v743
  %v842 = vpop.f32.mrb[0].mxu0
  %v843 = vadd.f32 0.0, %v842
  %v844 = vpop.f32.mrb[0].mxu0
  %845 = vmatprep.mubr.f32.mxu0 0.0
  %846 = vmatmul.mubr.f32.gmra.mrb[0].mxu0 %v746
  %v847 = vpop.f32.mrb[0].mxu0
  %v848 = vadd.f32 0.0, %v847
  %v849 = vpop.f32.mrb[0].mxu0
  %850 = vmatprep.mubr.f32.mxu0 0.0
  %851 = vmatmul.mubr.f32.gmra.mrb[0].mxu0 %v749
  %v852 = vpop.f32.mrb[0].mxu0
  %v853 = vadd.f32 0.0, %v852
  %v854 = vpop.f32.mrb[0].mxu0
  %855 = vdwg.mxu0
  %v856 = vmul.f32 %v205, %v818
  %v857 = vmul.f32 %v206, %v823
  %v858 = vmul.f32 %v207, %v828
  %v859 = vmul.f32 %v208, %v833
  %v860 = vmul.f32 %v209, %v838
  %v861 = vmul.f32 %v210, %v843
  %v862 = vmul.f32 %v211, %v848
  %v863 = vmul.f32 %v212, %v853
  %v864 = vlaneseq
  %v865 = vshrl.u32 %v864, 7
  %v866 = vsub.s32 0, %v865
  %v867 = vrot.slane %v320, %v866
  %v868 = vadd.f32 %v856, %v867
  %v869 = vadd.f32 %v857, %v867
  %v870 = vadd.f32 %v858, %v867
  %v871 = vadd.f32 %v859, %v867
  %v872 = vadd.f32 %v860, %v867
  %v873 = vadd.f32 %v861, %v867
  %v874 = vadd.f32 %v862, %v867
  %v875 = vadd.f32 %v863, %v867
  %v876 = vmax.f32 %v868, 0.0
  %v877 = vmax.f32 %v869, 0.0
  %v878 = vmax.f32 %v870, 0.0
  %v879 = vmax.f32 %v871, 0.0
  %v880 = vmax.f32 %v872, 0.0
  %v881 = vmax.f32 %v873, 0.0
  %v882 = vmax.f32 %v874, 0.0
  %v883 = vmax.f32 %v875, 0.0
  %vm884 = vcmask 261120
  %v886 = vsel %vm884, %v876, 0
  %v889 = vsel %vm884, %v877, 0
  %v892 = vsel %vm884, %v878, 0
  %v895 = vsel %vm884, %v879, 0
  %v898 = vsel %vm884, %v880, 0
  %v901 = vsel %vm884, %v881, 0
  %v904 = vsel %vm884, %v882, 0
  %v907 = vsel %vm884, %v883, 0
  %909 = vmatprep.subr.mxu0 0.0
  %910 = vmatpush1.msra.mxu0 %v321
  %911 = vmatprep.subr.mxu0 0.0
  %912 = vmatpush1.msra.mxu0 %v322
  %913 = vmatprep.subr.mxu0 0.0
  %914 = vmatpush1.msra.mxu0 %v323
  %915 = vmatprep.subr.mxu0 0.0
  %916 = vmatpush1.msra.mxu0 %v324
  %917 = vmatprep.subr.mxu0 0.0
  %918 = vmatpush1.msra.mxu0 0.0
  %919 = vmatprep.subr.mxu0 0.0
  %920 = vmatpush1.msra.mxu0 0.0
  %921 = vmatprep.subr.mxu0 0.0
  %922 = vmatpush1.msra.mxu0 0.0
  %923 = vmatprep.subr.mxu0 0.0
  %924 = vmatpush1.msra.mxu0 0.0
  %925 = vmatprep.subr.mxu0 0.0
  %926 = vmatpush1.msra.mxu0 0.0
  %927 = vmatprep.subr.mxu0 0.0
  %928 = vmatpush1.msra.mxu0 0.0
  %929 = vmatprep.subr.mxu0 0.0
  %930 = vmatpush1.msra.mxu0 0.0
  %931 = vmatprep.subr.mxu0 0.0
  %932 = vmatpush1.msra.mxu0 0.0
  %933 = vmatprep.subr.mxu0 0.0
  %934 = vmatpush1.msra.mxu0 0.0
  %935 = vmatprep.subr.mxu0 0.0
  %936 = vmatpush1.msra.mxu0 0.0
  %937 = vmatprep.subr.mxu0 0.0
  %938 = vmatpush1.msra.mxu0 0.0
  %939 = vmatprep.subr.mxu0 0.0
  %940 = vmatpush1.msra.mxu0 0.0
  %941 = vmatprep.subr.mxu0 0.0
  %942 = vmatpush1.msra.mxu0 0.0
  %943 = vmatprep.subr.mxu0 0.0
  %944 = vmatpush1.msra.mxu0 0.0
  %945 = vmatprep.subr.mxu0 0.0
  %946 = vmatpush1.msra.mxu0 0.0
  %947 = vmatprep.subr.mxu0 0.0
  %948 = vmatpush1.msra.mxu0 0.0
  %949 = vmatprep.subr.mxu0 0.0
  %950 = vmatpush1.msra.mxu0 0.0
  %951 = vmatprep.subr.mxu0 0.0
  %952 = vmatpush1.msra.mxu0 0.0
  %953 = vmatprep.subr.mxu0 0.0
  %954 = vmatpush1.msra.mxu0 0.0
  %955 = vmatprep.subr.mxu0 0.0
  %956 = vmatpush1.msra.mxu0 0.0
  %957 = vmatprep.subr.mxu0 0.0
  %958 = vmatpush1.msra.mxu0 0.0
  %959 = vmatprep.subr.mxu0 0.0
  %960 = vmatpush1.msra.mxu0 0.0
  %961 = vmatprep.subr.mxu0 0.0
  %962 = vmatpush1.msra.mxu0 0.0
  %963 = vmatprep.subr.mxu0 0.0
  %964 = vmatpush1.msra.mxu0 0.0
  %965 = vmatprep.subr.mxu0 0.0
  %966 = vmatpush1.msra.mxu0 0.0
  %967 = vmatprep.subr.mxu0 0.0
  %968 = vmatpush1.msra.mxu0 0.0
  %969 = vmatprep.subr.mxu0 0.0
  %970 = vmatpush1.msra.mxu0 0.0
  %971 = vmatprep.subr.mxu0 0.0
  %972 = vmatpush1.msra.mxu0 0.0
  %973 = vmatprep.mubr.f32.mxu0 0.0
  %974 = vmatmul.mubr.f32.gmra.mrb[0].mxu0 %v886
  %v975 = vpop.f32.mrb[0].mxu0
  %v976 = vadd.f32 0.0, %v975
  %v977 = vpop.f32.mrb[0].mxu0
  %978 = vmatprep.mubr.f32.mxu0 0.0
  %979 = vmatmul.mubr.f32.gmra.mrb[0].mxu0 %v889
  %v980 = vpop.f32.mrb[0].mxu0
  %v981 = vadd.f32 0.0, %v980
  %v982 = vpop.f32.mrb[0].mxu0
  %983 = vmatprep.mubr.f32.mxu0 0.0
  %984 = vmatmul.mubr.f32.gmra.mrb[0].mxu0 %v892
  %v985 = vpop.f32.mrb[0].mxu0
  %v986 = vadd.f32 0.0, %v985
  %v987 = vpop.f32.mrb[0].mxu0
  %988 = vmatprep.mubr.f32.mxu0 0.0
  %989 = vmatmul.mubr.f32.gmra.mrb[0].mxu0 %v895
  %v990 = vpop.f32.mrb[0].mxu0
  %v991 = vadd.f32 0.0, %v990
  %v992 = vpop.f32.mrb[0].mxu0
  %993 = vmatprep.mubr.f32.mxu0 0.0
  %994 = vmatmul.mubr.f32.gmra.mrb[0].mxu0 %v898
  %v995 = vpop.f32.mrb[0].mxu0
  %v996 = vadd.f32 0.0, %v995
  %v997 = vpop.f32.mrb[0].mxu0
  %998 = vmatprep.mubr.f32.mxu0 0.0
  %999 = vmatmul.mubr.f32.gmra.mrb[0].mxu0 %v901
  %v1000 = vpop.f32.mrb[0].mxu0
  %v1001 = vadd.f32 0.0, %v1000
  %v1002 = vpop.f32.mrb[0].mxu0
  %1003 = vmatprep.mubr.f32.mxu0 0.0
  %1004 = vmatmul.mubr.f32.gmra.mrb[0].mxu0 %v904
  %v1005 = vpop.f32.mrb[0].mxu0
  %v1006 = vadd.f32 0.0, %v1005
  %v1007 = vpop.f32.mrb[0].mxu0
  %1008 = vmatprep.mubr.f32.mxu0 0.0
  %1009 = vmatmul.mubr.f32.gmra.mrb[0].mxu0 %v907
  %v1010 = vpop.f32.mrb[0].mxu0
  %v1011 = vadd.f32 0.0, %v1010
  %v1012 = vpop.f32.mrb[0].mxu0
  %1013 = vdwg.mxu0
  %v1014 = vmul.f32 %v221, %v976
  %v1015 = vmul.f32 %v222, %v981
  %v1016 = vmul.f32 %v223, %v986
  %v1017 = vmul.f32 %v224, %v991
  %v1018 = vmul.f32 %v225, %v996
  %v1019 = vmul.f32 %v226, %v1001
  %v1020 = vmul.f32 %v227, %v1006
  %v1021 = vmul.f32 %v228, %v1011
  %1022 = vmatprep.subr.mxu0 0.0
  %1023 = vmatpush1.msra.mxu0 %v1014
  %1024 = vmatprep.subr.mxu0 0.0
  %1025 = vmatpush1.msra.mxu0 %v1015
  %1026 = vmatprep.subr.mxu0 0.0
  %1027 = vmatpush1.msra.mxu0 %v1016
  %1028 = vmatprep.subr.mxu0 0.0
  %1029 = vmatpush1.msra.mxu0 %v1017
  %1030 = vmatprep.subr.mxu0 0.0
  %1031 = vmatpush1.msra.mxu0 %v1018
  %1032 = vmatprep.subr.mxu0 0.0
  %1033 = vmatpush1.msra.mxu0 %v1019
  %1034 = vmatprep.subr.mxu0 0.0
  %1035 = vmatpush1.msra.mxu0 %v1020
  %1036 = vmatprep.subr.mxu0 0.0
  %1037 = vmatpush1.msra.mxu0 %v1021
  %1038 = vmatprep.subr.mxu0 0.0
  %1039 = vmatpush1.msra.mxu0 0.0
  %1040 = vmatprep.subr.mxu0 0.0
  %1041 = vmatpush1.msra.mxu0 0.0
  %1042 = vmatprep.subr.mxu0 0.0
  %1043 = vmatpush1.msra.mxu0 0.0
  %1044 = vmatprep.subr.mxu0 0.0
  %1045 = vmatpush1.msra.mxu0 0.0
  %1046 = vmatprep.subr.mxu0 0.0
  %1047 = vmatpush1.msra.mxu0 0.0
  %1048 = vmatprep.subr.mxu0 0.0
  %1049 = vmatpush1.msra.mxu0 0.0
  %1050 = vmatprep.subr.mxu0 0.0
  %1051 = vmatpush1.msra.mxu0 0.0
  %1052 = vmatprep.subr.mxu0 0.0
  %1053 = vmatpush1.msra.mxu0 0.0
  %1054 = vmatprep.subr.mxu0 0.0
  %1055 = vmatpush1.msra.mxu0 0.0
  %1056 = vmatprep.subr.mxu0 0.0
  %1057 = vmatpush1.msra.mxu0 0.0
  %1058 = vmatprep.subr.mxu0 0.0
  %1059 = vmatpush1.msra.mxu0 0.0
  %1060 = vmatprep.subr.mxu0 0.0
  %1061 = vmatpush1.msra.mxu0 0.0
  %1062 = vmatprep.subr.mxu0 0.0
  %1063 = vmatpush1.msra.mxu0 0.0
  %1064 = vmatprep.subr.mxu0 0.0
  %1065 = vmatpush1.msra.mxu0 0.0
  %1066 = vmatprep.subr.mxu0 0.0
  %1067 = vmatpush1.msra.mxu0 0.0
  %1068 = vmatprep.subr.mxu0 0.0
  %1069 = vmatpush1.msra.mxu0 0.0
  %1070 = vmatprep.subr.mxu0 0.0
  %1071 = vmatpush1.msra.mxu0 0.0
  %1072 = vmatprep.subr.mxu0 0.0
  %1073 = vmatpush1.msra.mxu0 0.0
  %1074 = vmatprep.subr.mxu0 0.0
  %1075 = vmatpush1.msra.mxu0 0.0
  %1076 = vmatprep.subr.mxu0 0.0
  %1077 = vmatpush1.msra.mxu0 0.0
  %1078 = vmatprep.subr.mxu0 0.0
  %1079 = vmatpush1.msra.mxu0 0.0
  %1080 = vmatprep.subr.mxu0 0.0
  %1081 = vmatpush1.msra.mxu0 0.0
  %1082 = vmatprep.subr.mxu0 0.0
  %1083 = vmatpush1.msra.mxu0 0.0
  %1084 = vmatprep.subr.mxu0 0.0
  %1085 = vmatpush1.msra.mxu0 0.0
  %1086 = vmatprep.mubr.f32.mxu0 0.0
  %1087 = vmatmul.mubr.f32.gmra.mrb[0].mxu0 %v728
  %v1088 = vpop.f32.mrb[0].mxu0
  %v1089 = vadd.f32 0.0, %v1088
  %v1090 = vpop.f32.mrb[0].mxu0
  %1091 = vmatprep.mubr.f32.mxu0 0.0
  %1092 = vmatmul.mubr.f32.gmra.mrb[0].mxu0 %v731
  %v1093 = vpop.f32.mrb[0].mxu0
  %v1094 = vadd.f32 0.0, %v1093
  %v1095 = vpop.f32.mrb[0].mxu0
  %1096 = vmatprep.mubr.f32.mxu0 0.0
  %1097 = vmatmul.mubr.f32.gmra.mrb[0].mxu0 %v734
  %v1098 = vpop.f32.mrb[0].mxu0
  %v1099 = vadd.f32 0.0, %v1098
  %v1100 = vpop.f32.mrb[0].mxu0
  %1101 = vmatprep.mubr.f32.mxu0 0.0
  %1102 = vmatmul.mubr.f32.gmra.mrb[0].mxu0 %v737
  %v1103 = vpop.f32.mrb[0].mxu0
  %v1104 = vadd.f32 0.0, %v1103
  %v1105 = vpop.f32.mrb[0].mxu0
  %1106 = vmatprep.mubr.f32.mxu0 0.0
  %1107 = vmatmul.mubr.f32.gmra.mrb[0].mxu0 %v740
  %v1108 = vpop.f32.mrb[0].mxu0
  %v1109 = vadd.f32 0.0, %v1108
  %v1110 = vpop.f32.mrb[0].mxu0
  %1111 = vmatprep.mubr.f32.mxu0 0.0
  %1112 = vmatmul.mubr.f32.gmra.mrb[0].mxu0 %v743
  %v1113 = vpop.f32.mrb[0].mxu0
  %v1114 = vadd.f32 0.0, %v1113
  %v1115 = vpop.f32.mrb[0].mxu0
  %1116 = vmatprep.mubr.f32.mxu0 0.0
  %1117 = vmatmul.mubr.f32.gmra.mrb[0].mxu0 %v746
  %v1118 = vpop.f32.mrb[0].mxu0
  %v1119 = vadd.f32 0.0, %v1118
  %v1120 = vpop.f32.mrb[0].mxu0
  %1121 = vmatprep.mubr.f32.mxu0 0.0
  %1122 = vmatmul.mubr.f32.gmra.mrb[0].mxu0 %v749
  %v1123 = vpop.f32.mrb[0].mxu0
  %v1124 = vadd.f32 0.0, %v1123
  %v1125 = vpop.f32.mrb[0].mxu0
  %1126 = vdwg.mxu0
  %v1127 = vmul.f32 %v205, %v1089
  %v1128 = vmul.f32 %v206, %v1094
  %v1129 = vmul.f32 %v207, %v1099
  %v1130 = vmul.f32 %v208, %v1104
  %v1131 = vmul.f32 %v209, %v1109
  %v1132 = vmul.f32 %v210, %v1114
  %v1133 = vmul.f32 %v211, %v1119
  %v1134 = vmul.f32 %v212, %v1124
  %v1135 = vlaneseq
  %v1136 = vshrl.u32 %v1135, 7
  %v1137 = vsub.s32 0, %v1136
  %v1138 = vrot.slane %v325, %v1137
  %v1139 = vadd.f32 %v1127, %v1138
  %v1140 = vadd.f32 %v1128, %v1138
  %v1141 = vadd.f32 %v1129, %v1138
  %v1142 = vadd.f32 %v1130, %v1138
  %v1143 = vadd.f32 %v1131, %v1138
  %v1144 = vadd.f32 %v1132, %v1138
  %v1145 = vadd.f32 %v1133, %v1138
  %v1146 = vadd.f32 %v1134, %v1138
  %1147 = vst [vmem:[%s5] sm:$0xff] %v1139
  %1148 = vst [vmem:[%s5 + $0x8] sm:$0xff] %v1140
  %1149 = vst [vmem:[%s5 + $0x10] sm:$0xff] %v1141
  %1150 = vst [vmem:[%s5 + $0x18] sm:$0xff] %v1142
  %1151 = vst [vmem:[%s5 + $0x20] sm:$0xff] %v1143
  %1152 = vst [vmem:[%s5 + $0x28] sm:$0xff] %v1144
  %1153 = vst [vmem:[%s5 + $0x30] sm:$0xff] %v1145
  %1154 = vst [vmem:[%s5 + $0x38] sm:$0xff] %v1146
  // Predicated region
  $region22: #{gcn_gets_forward.1} parent=0 // pred_check
    _
  $region23: #{gcn_gets_forward.1} parent=0 // pred_check_branch
    %1156 = sbr.rel (0) target = $region25
  $region24: #{gcn_gets_forward.1} parent=0 // pred_region
    _
  $region25: #{gcn_gets_forward.1} parent=0 // pred_fallthru
    _
  // Predicated region
  $region26: #{gcn_gets_forward.1} parent=0 // pred_check
    _
  $region27: #{gcn_gets_forward.1} parent=0 // pred_check_branch
    %1158 = sbr.rel (0) target = $region29
  $region28: #{gcn_gets_forward.1} parent=0 // pred_region
    _
  $region29: #{gcn_gets_forward.1} parent=0 // pred_fallthru
    _

</llo_original>
